<compile_context>
chip_gen: v6e
topology: v6e:2x2x1
jax: 0.10.0
libtpu: 0.0.40
codegen_flags: <defaults>
</compile_context>

<pallas_src>
import math

import jax
import jax.numpy as jnp
from jax import lax
from jax.experimental import pallas as pl
from jax.experimental.pallas import tpu as pltpu


# -----------------------------------------------------------------------------
# Kernels
# -----------------------------------------------------------------------------
def colsum_kernel(q_ref, k_ref, wkT_ref, wqT_ref, cs_ref, wk_scr):
    """Pass 1: accumulate col_sum[b, k] = sum_q softmax(w_q @ w_k^T)[q, k].

    grid = (B, n_q_tiles).  The query-tile axis reduces into cs_ref (constant
    output block index -> resident accumulator).  The L2-normalised bf16 w_k
    is computed on the first tile of each batch and kept in VMEM scratch.
    """
    lq = pl.program_id(1)
    f32, bf16 = jnp.float32, jnp.bfloat16

    @pl.when(lq == 0)
    def _init():
        w_k = jnp.dot(k_ref[0], wkT_ref[...], preferred_element_type=f32)
        w_k = w_k * lax.rsqrt(
            jnp.maximum(jnp.sum(w_k * w_k, axis=-1, keepdims=True), 1e-24))
        wk_scr[...] = w_k.astype(bf16)
        cs_ref[...] = jnp.zeros_like(cs_ref)

    w_q = jnp.dot(q_ref[0], wqT_ref[...], preferred_element_type=f32)
    w_q = w_q * lax.rsqrt(
        jnp.maximum(jnp.sum(w_q * w_q, axis=-1, keepdims=True), 1e-24))

    # dot_prod = w_q @ w_k^T (temp = 1): contract last axes, no transpose.
    # Zero-padded key columns contribute exactly zero.
    dot = lax.dot_general(
        w_q.astype(bf16), wk_scr[...],
        dimension_numbers=(((1,), (1,)), ((), ())),
        preferred_element_type=f32)                                # (tq, Lk)

    m = jnp.max(dot, axis=-1, keepdims=True)
    e = jnp.exp(dot - m)
    aff = e * pl.reciprocal(jnp.sum(e, axis=-1, keepdims=True), approx=True)

    cs_ref[0] = cs_ref[0] + jnp.sum(aff, axis=0, keepdims=True)   # (1, Lk)


def output_kernel(inv_ref, q_ref, k_ref, v_ref,
                  wkT_ref, wqT_ref, wvT_ref, wtT_ref,
                  o_ref, wk_scr, wv_scr):
    """Pass 2: out tile = relu((q - aff @ w_v_scaled) @ Wtrans^T).

    The query-axis normalisation is applied to the rows of w_v (algebraically
    identical to rescaling the (Lq, Lk) affinity but far cheaper).  Normalised
    bf16 w_k and the scaled bf16 w_v are built on the first query tile of each
    batch and reused from VMEM scratch for the remaining tiles.
    """
    lq = pl.program_id(1)
    f32, bf16 = jnp.float32, jnp.bfloat16

    @pl.when(lq == 0)
    def _init():
        w_k = jnp.dot(k_ref[0], wkT_ref[...], preferred_element_type=f32)
        w_k = w_k * lax.rsqrt(
            jnp.maximum(jnp.sum(w_k * w_k, axis=-1, keepdims=True), 1e-24))
        wk_scr[...] = w_k.astype(bf16)

        w_v = jnp.dot(v_ref[0], wvT_ref[...], preferred_element_type=f32)
        # inv_ref[0] is (Lk, 1): per-key 1/(1e-9 + col_sum), lane-broadcast.
        wv_scr[...] = (w_v * inv_ref[0]).astype(bf16)

    w_q = jnp.dot(q_ref[0], wqT_ref[...], preferred_element_type=f32)
    w_q = w_q * lax.rsqrt(
        jnp.maximum(jnp.sum(w_q * w_q, axis=-1, keepdims=True), 1e-24))

    dot = lax.dot_general(
        w_q.astype(bf16), wk_scr[...],
        dimension_numbers=(((1,), (1,)), ((), ())),
        preferred_element_type=f32)                                # (tq, Lk)

    m = jnp.max(dot, axis=-1, keepdims=True)
    e = jnp.exp(dot - m)
    # Cast to bf16 right after the softmax so the f32 temporaries die early.
    aff = (e * pl.reciprocal(jnp.sum(e, axis=-1, keepdims=True),
                             approx=True)).astype(bf16)

    out = jnp.dot(aff, wv_scr[...], preferred_element_type=f32)    # (tq, D)
    res = (q_ref[0].astype(f32) - out).astype(bf16)
    out2 = jnp.dot(res, wtT_ref[...], preferred_element_type=f32)  # (tq, D)
    o_ref[0] = jnp.maximum(out2, 0.0).astype(o_ref.dtype)


# -----------------------------------------------------------------------------
# Wrapper
# -----------------------------------------------------------------------------
def _prepare_weights(params):
    """One-time weight prep (hoist/cache across calls): pre-transpose so the
    kernels never transpose, zero-pad the key dim to a multiple of 128
    (mathematically exact), and pre-cast to bf16."""
    wk_w, wq_w, wv_w, wt_w = params          # (Dk, D), (Dk, D), (D, D), (D, D)
    dk = wk_w.shape[0]
    dkp = ((dk + 127) // 128) * 128
    # NOTE: if the model allows, pick key_feature_dim as a multiple of 128 so
    # this padding is useful capacity instead of extra MXU work.

    def pad_t(w):                            # (Dk, D) -> (D, Dkp) bf16
        wt = jnp.transpose(w)
        pad = dkp - w.shape[0]
        if pad:
            wt = jnp.pad(wt, ((0, 0), (0, pad)))
        return wt.astype(jnp.bfloat16)

    return (pad_t(wk_w), pad_t(wq_w),
            jnp.transpose(wv_w).astype(jnp.bfloat16),
            jnp.transpose(wt_w).astype(jnp.bfloat16))


def _pick_tq(lq, target=256):
    """Largest query tile <= target that divides Lq and is a multiple of 8."""
    if lq <= target:
        return lq
    for t in range(target - target % 8, 7, -8):
        if lq % t == 0:
            return t
    return lq


def _vmem_limit_bytes():
    """64 MiB on 128-MiB-VMEM parts (v5e/v6e); 32 MiB on v7x (64 MiB physical)."""
    try:
        cap = int(getattr(pltpu.get_tpu_info(), "vmem_capacity_bytes", 0))
    except Exception:   # best-effort hardware query only; never affects math
        cap = 0
    return (64 if cap >= 128 * 1024 * 1024 else 32) * 1024 * 1024


def relation_unit(query, key, value, params, *, tq=None):
    """query/key/value: (L, B, D) float32 arrays (PyTorch (seq, batch, feat))."""
    Lq, B, D = query.shape
    Lk = key.shape[0]

    wkT, wqT, wvT, wtT = _prepare_weights(params)
    Dkp = wkT.shape[1]

    # (L,B,D) -> (B,L,D) fused with the bf16 cast: one XLA pass per tensor and
    # half the HBM bytes into the kernels.
    # TODO(synk): keep (B,L,D) bf16 end-to-end in the surrounding model to drop
    # these passes (and the final transpose back) entirely.
    bf16 = jnp.bfloat16
    q_b = jnp.transpose(query, (1, 0, 2)).astype(bf16)
    k_b = jnp.transpose(key, (1, 0, 2)).astype(bf16)
    v_b = jnp.transpose(value, (1, 0, 2)).astype(bf16)

    if tq is None:
        tq = _pick_tq(Lq)
    if tq != Lq and (Lq % tq != 0 or tq % 8 != 0):
        tq = Lq                               # full-length block is always legal
    n_lq = Lq // tq

    cparams = pltpu.CompilerParams(
        dimension_semantics=("parallel", "arbitrary"),
        vmem_limit_bytes=_vmem_limit_bytes())

    q_spec = pl.BlockSpec((1, tq, D), lambda b, l: (b, l, 0))
    kv_spec = pl.BlockSpec((1, Lk, D), lambda b, l: (b, 0, 0))
    wk_spec = pl.BlockSpec((D, Dkp), lambda b, l: (0, 0))
    wq_spec = pl.BlockSpec((D, Dkp), lambda b, l: (0, 0))
    wv_spec = pl.BlockSpec((D, D), lambda b, l: (0, 0))
    wt_spec = pl.BlockSpec((D, D), lambda b, l: (0, 0))

    # Pass 1: per-batch query-axis column sums of the softmaxed affinity.
    col_sum = pl.pallas_call(
        colsum_kernel,
        out_shape=jax.ShapeDtypeStruct((B, 1, Lk), jnp.float32),
        grid=(B, n_lq),
        in_specs=[q_spec, kv_spec, wk_spec, wq_spec],
        out_specs=pl.BlockSpec((1, 1, Lk), lambda b, l: (b, 0, 0)),
        scratch_shapes=[pltpu.VMEM((Lk, Dkp), bf16)],
        compiler_params=cparams,
    )(q_b, k_b, wkT, wqT)

    # Tiny exact reciprocal on the XLA side, laid out (B, Lk, 1) so pass 2 can
    # scale w_v rows with a lane-broadcast (no in-kernel transpose).
    inv_col = 1.0 / (1e-9 + jnp.swapaxes(col_sum, 1, 2))          # (B, Lk, 1)

    # Pass 2: output tiles.
    out_b = pl.pallas_call(
        output_kernel,
        out_shape=jax.ShapeDtypeStruct((B, Lq, D), jnp.float32),
        grid=(B, n_lq),
        in_specs=[pl.BlockSpec((1, Lk, 1), lambda b, l: (b, 0, 0)),
                  q_spec, kv_spec, kv_spec,
                  wk_spec, wq_spec, wv_spec, wt_spec],
        out_specs=pl.BlockSpec((1, tq, D), lambda b, l: (b, l, 0)),
        scratch_shapes=[pltpu.VMEM((Lk, Dkp), bf16),
                        pltpu.VMEM((Lk, D), bf16)],
        compiler_params=cparams,
    )(inv_col, q_b, k_b, v_b, wkT, wqT, wvT, wtT)

    # Back to the PyTorch (Lq, B, D) output layout.
    return jnp.transpose(out_b, (1, 0, 2))


# -----------------------------------------------------------------------------
# Pure-JAX f32 reference (mirrors the PyTorch forward) and init helpers
# -----------------------------------------------------------------------------
def relation_unit_reference(query, key, value, params):
    wk_w, wq_w, wv_w, wt_w = params
    w_k = jnp.einsum('lbd,kd->lbk', key, wk_w)
    w_k = w_k / jnp.maximum(jnp.linalg.norm(w_k, axis=-1, keepdims=True), 1e-12)
    w_q = jnp.einsum('lbd,kd->lbk', query, wq_w)
    w_q = w_q / jnp.maximum(jnp.linalg.norm(w_q, axis=-1, keepdims=True), 1e-12)
    dot = jnp.einsum('qbk,sbk->bqs', w_q, w_k)           # (B, Lq, Lk)
    aff = jax.nn.softmax(dot, axis=-1)
    aff = aff / (1e-9 + jnp.sum(aff, axis=1, keepdims=True))
    w_v = jnp.einsum('lbd,ed->lbe', value, wv_w)         # (Lk, B, D)
    out = jnp.einsum('bqs,sbd->qbd', aff, w_v)           # (Lq, B, D)
    out = jnp.einsum('lbd,ed->lbe', query - out, wt_w)
    return jax.nn.relu(out)


def init_params(key, feature_dim, key_feature_dim):
    k1, k2, k3, k4 = jax.random.split(key, 4)
    std_k = math.sqrt(2.0 / key_feature_dim)
    std_v = math.sqrt(2.0 / feature_dim)
    wk_w = std_k * jax.random.normal(k1, (key_feature_dim, feature_dim), jnp.float32)
    wq_w = std_k * jax.random.normal(k2, (key_feature_dim, feature_dim), jnp.float32)
    wv_w = std_v * jax.random.normal(k3, (feature_dim, feature_dim), jnp.float32)
    bound = 1.0 / math.sqrt(feature_dim)                 # nn.Linear default-ish
    wt_w = jax.random.uniform(k4, (feature_dim, feature_dim), jnp.float32,
                              minval=-bound, maxval=bound)
    return wk_w, wq_w, wv_w, wt_w


if __name__ == "__main__":
    seq = 16               # Lq = Lk = 16
    batch = 2
    feature_dim = 32
    key_feature_dim = 16

    root = jax.random.PRNGKey(0)
    kq, kk, kv, kp = jax.random.split(root, 4)

    query = jax.random.normal(kq, (seq, batch, feature_dim), jnp.float32)
    key = jax.random.normal(kk, (seq, batch, feature_dim), jnp.float32)
    value = jax.random.normal(kv, (seq, batch, feature_dim), jnp.float32)
    params = init_params(kp, feature_dim, key_feature_dim)

    # tq=8 -> 2 query tiles per batch: exercises the tiled two-pass
    # column-sum path (the production code path), not just the trivial tile.
    out = relation_unit(query, key, value, params, tq=8)
    jax.block_until_ready(out)
    assert out.shape == (seq, batch, feature_dim)

    # Validate against the f32 reference (loose tolerance: bf16 MXU inputs and
    # approx softmax reciprocals are intentionally used in the kernels).
    ref = relation_unit_reference(query, key, value, params)
    max_err = float(jnp.max(jnp.abs(out - ref)))
    assert jnp.allclose(out, ref, atol=8e-2, rtol=5e-2), f"max abs err {max_err}"

    print("KERNEL_OK")
</pallas_src>

<mosaic_0001>
module attributes {stable_mosaic.version = 11 : i64} {
  func.func @colsum_kernel(%arg0: i32, %arg1: i32, %arg2: memref<1x8x32xbf16, #tpu.memory_space<vmem>>, %arg3: memref<1x16x32xbf16, #tpu.memory_space<vmem>>, %arg4: memref<32x128xbf16, #tpu.memory_space<vmem>>, %arg5: memref<32x128xbf16, #tpu.memory_space<vmem>>, %arg6: memref<1x1x16xf32, #tpu.memory_space<vmem>>, %arg7: memref<16x128xbf16, #tpu.memory_space<vmem>>) attributes {dimension_semantics = [#tpu.dimension_semantics<parallel>, #tpu.dimension_semantics<arbitrary>], iteration_bounds = array<i64: 2, 2>, scalar_prefetch = 0 : i64, scratch_operands = 1 : i64, tpu.core_type = #tpu.core_type<tc>, window_params = [{transform_indices = @transform_0, window_bounds = array<i64: 1, 8, 32>}, {transform_indices = @transform_1, window_bounds = array<i64: 1, 16, 32>}, {pipeline_mode = #tpu.pipeline_mode<synchronous>, transform_indices = @transform_2, window_bounds = array<i64: 32, 128>}, {pipeline_mode = #tpu.pipeline_mode<synchronous>, transform_indices = @transform_3, window_bounds = array<i64: 32, 128>}, {transform_indices = @transform_4, window_bounds = array<i64: 1, 1, 16>}]} {
    %c0_i32 = arith.constant 0 : i32
    %0 = arith.cmpi eq, %arg1, %c0_i32 : i32
    %1 = arith.extui %0 : i1 to i32
    %c0_i32_0 = arith.constant 0 : i32
    %2 = arith.cmpi ne, %1, %c0_i32_0 : i32
    scf.if %2 {
      %c0_19 = arith.constant 0 : index
      %c0_20 = arith.constant 0 : index
      %c0_21 = arith.constant 0 : index
      %36 = vector.load %arg3[%c0_19, %c0_20, %c0_21] : memref<1x16x32xbf16, #tpu.memory_space<vmem>>, vector<1x16x32xbf16>
      %37 = vector.shape_cast %36 : vector<1x16x32xbf16> to vector<16x32xbf16>
      %c0_22 = arith.constant 0 : index
      %c0_23 = arith.constant 0 : index
      %38 = vector.load %arg4[%c0_22, %c0_23] : memref<32x128xbf16, #tpu.memory_space<vmem>>, vector<32x128xbf16>
      %cst_24 = arith.constant dense<0.000000e+00> : vector<16x128xf32>
      %39 = tpu.matmul %37, %38, %cst_24 {dimension_numbers = #tpu.dot_dimension_numbers<[1], [0], [0], [1], [0, 0, 1, 1], [], []>} : vector<16x32xbf16>, vector<32x128xbf16>, vector<16x128xf32> -> vector<16x128xf32>
      %40 = arith.mulf %39, %39 : vector<16x128xf32>
      %cst_25 = arith.constant dense<0.000000e+00> : vector<16xf32>
      %41 = vector.multi_reduction <add>, %40, %cst_25 [1] : vector<16x128xf32> to vector<16xf32>
      %42 = vector.shape_cast %41 : vector<16xf32> to vector<16x1xf32>
      %cst_26 = arith.constant 1.000000e-24 : f32
      %43 = vector.broadcast %cst_26 : f32 to vector<16x1xf32>
      %44 = arith.maximumf %42, %43 : vector<16x1xf32>
      %45 = math.rsqrt %44 : vector<16x1xf32>
      %46 = vector.broadcast %45 : vector<16x1xf32> to vector<16x128xf32>
      %47 = arith.mulf %39, %46 : vector<16x128xf32>
      %48 = arith.truncf %47 : vector<16x128xf32> to vector<16x128xbf16>
      %c0_27 = arith.constant 0 : index
      %c0_28 = arith.constant 0 : index
      %49 = vector.load %arg7[%c0_27, %c0_28] : memref<16x128xbf16, #tpu.memory_space<vmem>>, vector<16x128xbf16>
      tpu.vector_store %arg7[%c0_27, %c0_28], %48 {strides = array<i32>} : memref<16x128xbf16, #tpu.memory_space<vmem>>, vector<16x128xbf16>,
      %cst_29 = arith.constant 0.000000e+00 : f32
      %50 = vector.broadcast %cst_29 : f32 to vector<1x1x16xf32>
      %c0_30 = arith.constant 0 : index
      %c0_31 = arith.constant 0 : index
      %c0_32 = arith.constant 0 : index
      %51 = vector.load %arg6[%c0_30, %c0_31, %c0_32] : memref<1x1x16xf32, #tpu.memory_space<vmem>>, vector<1x1x16xf32>
      tpu.vector_store %arg6[%c0_30, %c0_31, %c0_32], %50 {strides = array<i32>} : memref<1x1x16xf32, #tpu.memory_space<vmem>>, vector<1x1x16xf32>,
    } else {
    }
    %c0 = arith.constant 0 : index
    %c0_1 = arith.constant 0 : index
    %c0_2 = arith.constant 0 : index
    %3 = vector.load %arg2[%c0, %c0_1, %c0_2] : memref<1x8x32xbf16, #tpu.memory_space<vmem>>, vector<1x8x32xbf16>
    %4 = vector.shape_cast %3 : vector<1x8x32xbf16> to vector<8x32xbf16>
    %c0_3 = arith.constant 0 : index
    %c0_4 = arith.constant 0 : index
    %5 = vector.load %arg5[%c0_3, %c0_4] : memref<32x128xbf16, #tpu.memory_space<vmem>>, vector<32x128xbf16>
    %cst = arith.constant dense<0.000000e+00> : vector<8x128xf32>
    %6 = tpu.matmul %4, %5, %cst {dimension_numbers = #tpu.dot_dimension_numbers<[1], [0], [0], [1], [0, 0, 1, 1], [], []>} : vector<8x32xbf16>, vector<32x128xbf16>, vector<8x128xf32> -> vector<8x128xf32>
    %7 = arith.mulf %6, %6 : vector<8x128xf32>
    %cst_5 = arith.constant dense<0.000000e+00> : vector<8xf32>
    %8 = vector.multi_reduction <add>, %7, %cst_5 [1] : vector<8x128xf32> to vector<8xf32>
    %9 = vector.shape_cast %8 : vector<8xf32> to vector<8x1xf32>
    %cst_6 = arith.constant 1.000000e-24 : f32
    %10 = vector.broadcast %cst_6 : f32 to vector<8x1xf32>
    %11 = arith.maximumf %9, %10 : vector<8x1xf32>
    %12 = math.rsqrt %11 : vector<8x1xf32>
    %13 = vector.broadcast %12 : vector<8x1xf32> to vector<8x128xf32>
    %14 = arith.mulf %6, %13 : vector<8x128xf32>
    %15 = arith.truncf %14 : vector<8x128xf32> to vector<8x128xbf16>
    %c0_7 = arith.constant 0 : index
    %c0_8 = arith.constant 0 : index
    %16 = vector.load %arg7[%c0_7, %c0_8] : memref<16x128xbf16, #tpu.memory_space<vmem>>, vector<16x128xbf16>
    %cst_9 = arith.constant dense<0.000000e+00> : vector<8x16xf32>
    %17 = tpu.matmul %15, %16, %cst_9 {dimension_numbers = #tpu.dot_dimension_numbers<[1], [1], [0], [0], [0, 0, 1, 0], [], []>} : vector<8x128xbf16>, vector<16x128xbf16>, vector<8x16xf32> -> vector<8x16xf32>
    %cst_10 = arith.constant dense<0xFF800000> : vector<8xf32>
    %18 = vector.multi_reduction <maximumf>, %17, %cst_10 [1] : vector<8x16xf32> to vector<8xf32>
    %19 = vector.shape_cast %18 : vector<8xf32> to vector<8x1xf32>
    %20 = vector.broadcast %19 : vector<8x1xf32> to vector<8x16xf32>
    %21 = arith.subf %17, %20 : vector<8x16xf32>
    %22 = math.exp %21 : vector<8x16xf32>
    %cst_11 = arith.constant dense<0.000000e+00> : vector<8xf32>
    %23 = vector.multi_reduction <add>, %22, %cst_11 [1] : vector<8x16xf32> to vector<8xf32>
    %24 = vector.shape_cast %23 : vector<8xf32> to vector<8x1xf32>
    %25 = tpu.reciprocal %24 {approx = true} : vector<8x1xf32> -> vector<8x1xf32>
    %26 = vector.broadcast %25 : vector<8x1xf32> to vector<8x16xf32>
    %27 = arith.mulf %22, %26 : vector<8x16xf32>
    %c0_12 = arith.constant 0 : index
    %c0_13 = arith.constant 0 : index
    %c0_14 = arith.constant 0 : index
    %28 = vector.load %arg6[%c0_12, %c0_13, %c0_14] : memref<1x1x16xf32, #tpu.memory_space<vmem>>, vector<1x1x16xf32>
    %29 = vector.shape_cast %28 : vector<1x1x16xf32> to vector<1x16xf32>
    %cst_15 = arith.constant dense<0.000000e+00> : vector<16xf32>
    %30 = vector.multi_reduction <add>, %27, %cst_15 [0] : vector<8x16xf32> to vector<16xf32>
    %31 = vector.shape_cast %30 : vector<16xf32> to vector<1x16xf32>
    %32 = arith.addf %29, %31 : vector<1x16xf32>
    %c0_16 = arith.constant 0 : index
    %c0_17 = arith.constant 0 : index
    %c0_18 = arith.constant 0 : index
    %33 = vector.load %arg6[%c0_16, %c0_17, %c0_18] : memref<1x1x16xf32, #tpu.memory_space<vmem>>, vector<1x1x16xf32>
    %34 = vector.shape_cast %33 : vector<1x1x16xf32> to vector<1x16xf32>
    %35 = vector.shape_cast %32 : vector<1x16xf32> to vector<1x1x16xf32>
    tpu.vector_store %arg6[%c0_16, %c0_17, %c0_18], %35 {strides = array<i32>} : memref<1x1x16xf32, #tpu.memory_space<vmem>>, vector<1x1x16xf32>,
    return
  }
  func.func @transform_0(%arg0: i32, %arg1: i32) -> (i32, i32, i32) {
    %c0_i32 = arith.constant 0 : i32
    %c0_i32_0 = arith.constant 0 : i32
    return %arg0, %arg1, %c0_i32 : i32, i32, i32
  }
  func.func @transform_1(%arg0: i32, %arg1: i32) -> (i32, i32, i32) {
    %c0_i32 = arith.constant 0 : i32
    %c0_i32_0 = arith.constant 0 : i32
    %c0_i32_1 = arith.constant 0 : i32
    return %arg0, %c0_i32, %c0_i32_0 : i32, i32, i32
  }
  func.func @transform_2(%arg0: i32, %arg1: i32) -> (i32, i32) {
    %c0_i32 = arith.constant 0 : i32
    %c0_i32_0 = arith.constant 0 : i32
    %c0_i32_1 = arith.constant 0 : i32
    return %c0_i32, %c0_i32_0 : i32, i32
  }
  func.func @transform_3(%arg0: i32, %arg1: i32) -> (i32, i32) {
    %c0_i32 = arith.constant 0 : i32
    %c0_i32_0 = arith.constant 0 : i32
    %c0_i32_1 = arith.constant 0 : i32
    return %c0_i32, %c0_i32_0 : i32, i32
  }
  func.func @transform_4(%arg0: i32, %arg1: i32) -> (i32, i32, i32) {
    %c0_i32 = arith.constant 0 : i32
    %c0_i32_0 = arith.constant 0 : i32
    %c0_i32_1 = arith.constant 0 : i32
    return %arg0, %c0_i32, %c0_i32_0 : i32, i32, i32
  }
}

</mosaic_0001>

<llo_original>
// kernel: tpu_custom_call.1
$region0: #{tpu_custom_call.1}
  #allocation0 [shape = 'u32[]', space=smem, size = 0x4, offset = 0x4, fixed_abs, tag = 'smem constant byte address 0x4 - core index']
  #allocation1 [shape = 'u32[144,128]{1,0:T(1,128)}', space=vmem, size = 0x12000, scoped, tag = 'internal scratch']
  #allocation2 [shape = 'bf16[16,128]{1,0:T(8,128)(2,1)}', space=vmem, size = 0x1000, scoped, tag = 'scratch operand']
  %s0 = inlined_call_operand.hbm [shape: bf16[2,16,32], index: 0, kind: input, shape index: {}]
  %s1 = inlined_call_operand.hbm [shape: bf16[2,16,32], index: 1, kind: input, shape index: {}]
  %s2 = inlined_call_operand.hbm [shape: bf16[32,128], index: 2, kind: input, shape index: {}]
  %s3 = inlined_call_operand.hbm [shape: bf16[32,128], index: 3, kind: input, shape index: {}]
  %s4 = inlined_call_operand.hbm [shape: f32[2,1,16], index: 4, kind: output, shape index: {}]
  %s5 = sld [smem:[#allocation0]]
  $region69: #{tpu_custom_call.1} parent=0
    _
  %s7 = ssub.s32 1, %s5
  %s8 = scalar_select 0, %s7, %s5
  $region1: #{tpu_custom_call.1} parent=0
    #allocation3 [shape = 'u8[4096]{0}', space=vmem, size = 0x1000, scoped, tag = 'input window, operand 0']
    #allocation4 [shape = 's32[2]{0}', space=sflag, size = 0x8, scoped, tag = 'scoped memory for tpu_custom_call.1']
    #allocation5 [shape = 's32[2]{0}', space=sflag, size = 0x8, scoped, tag = 'scoped memory for tpu_custom_call.1']
    #allocation6 [shape = 'u8[8192]{0}', space=vmem, size = 0x2000, scoped, tag = 'input window, operand 1']
    #allocation7 [shape = 's32[2]{0}', space=sflag, size = 0x8, scoped, tag = 'scoped memory for tpu_custom_call.1']
    #allocation8 [shape = 'u8[8192]{0}', space=vmem, size = 0x2000, scoped, tag = 'input window, operand 2, single buffered']
    #allocation9 [shape = 'u8[8192]{0}', space=vmem, size = 0x2000, scoped, tag = 'input window, operand 3, single buffered']
    #allocation10 [shape = 's32[1]{0}', space=sflag, size = 0x4, scoped, tag = 'scoped memory for tpu_custom_call.1']
    #allocation11 [shape = 'u8[1024]{0}', space=vmem, size = 0x400, scoped, tag = 'output window, operand 0']
    %9 = vsyncpa [#allocation4], 0
    %s10 = scalar_lea.sflag [#allocation4], 1
    %11 = vsyncpa %s10, 0
    %12 = vsyncpa [#allocation7], 0
    %s13 = scalar_lea.sflag [#allocation7], 1
    %14 = vsyncpa %s13, 0
    %15 = vsyncpa [#allocation10], 0
    %16 = vsyncpa [#allocation5], 0
    %s17 = scalar_lea.sflag [#allocation5], 1
    %18 = vsyncpa %s17, 0
    loop: start=0, step=1, limit=6
    $region2: #{tpu_custom_call.1} parent=1 // loop_pre_header
      _
    $region3: #{tpu_custom_call.1} parent=1 // loop_header
      %s20 = sphi 0, %s24
      %p21 = scmp.ge.s32.totalorder %s20, 6
      %s27 = sphi 0, %s39
      %s28 = sphi 0, %s35
      %s29 = sphi 0, %s27
      %s30 = sphi 0, %s28
      %s31 = sphi 0, %s29
      %s32 = sphi 0, %s30
      %s44 = sphi 0, %s46
      %s47 = sphi 0, %s44
      %s48 = sphi 0, %s47
      %s64 = sphi 0, %s48
      %s70 = sphi 0, %s72
      %s73 = sphi 0, %s70
      %s74 = sphi 0, %s73
      %s90 = sphi 0, %s74
      %s94 = sphi 0, %s94
      %s96 = sphi 0, %s94
      %s97 = sphi 0, %s96
      %s111 = sphi 0, %s97
      %s115 = sphi 0, %s115
      %s117 = sphi 0, %s115
      %s118 = sphi 0, %s117
      %s132 = sphi 0, %s118
      %s138 = sphi 0, %s140
      %s141 = sphi 0, %s138
      %s142 = sphi 0, %s141
      %s158 = sphi 0, %s142
    $region4: #{tpu_custom_call.1} parent=1 // loop_header_branch
      %23 = sbr.rel (%p21) target = $region8
    $region5: #{tpu_custom_call.1} parent=1 // loop_body
      %s25 = ssub.s32 %s20, 1
      %s26 = ssub.s32 %s20, 2
      %s33 = sadd.s32 1, %s28
      %p34 = scmp.ge.s32.totalorder %s33, 2
      %s35 = scalar_select %p34, 0, %s33
      %s36 = sadd.s32 1, %s27
      %s37 = scalar_select %p34, %s36, %s27
      %p38 = scmp.ge.s32.totalorder %s37, 2
      %s39 = scalar_select %p38, 0, %s37
      %s40 = ssub.s32 %s27, %s39
      %s41 = ssub.s32 %s28, %s35
      %s42 = sor.u32 %s40, %s41
      %p43 = scmp.eq.s32.totalorder %s42, 0
      %s45 = sadd.s32 %s44, 1
      %s46 = scalar_select %p43, %s44, %s45
      %p49 = pneg %p43
      %p50 = scmp.eq.s32.totalorder %s20, 3
      %p51 = por %p49, %p50
      %p52 = scmp.ne.s32.totalorder %s44, %s47
      %p53 = scmp.eq.s32.totalorder %s20, 0
      %p54 = por %p52, %p53
      %p55 = scmp.ne.s32.totalorder %s44, %s47
      %p56 = scmp.eq.s32.totalorder %s25, 3
      %p57 = por %p55, %p56
      %p58 = scmp.ne.s32.totalorder %s47, %s48
      %p59 = scmp.eq.s32.totalorder %s25, 0
      %p60 = por %p58, %p59
      %p61 = scmp.ne.s32.totalorder %s47, %s48
      %p62 = scmp.eq.s32.totalorder %s26, 3
      %p63 = por %p61, %p62
      %p65 = scmp.ne.s32.totalorder %s48, %s64
      %p66 = scmp.eq.s32.totalorder %s26, 0
      %p67 = por %p65, %p66
      %s68 = ssub.s32 %s27, %s39
      %p69 = scmp.eq.s32.totalorder %s68, 0
      %s71 = sadd.s32 %s70, 1
      %s72 = scalar_select %p69, %s70, %s71
      %p75 = pneg %p69
      %p76 = scmp.eq.s32.totalorder %s20, 3
      %p77 = por %p75, %p76
      %p78 = scmp.ne.s32.totalorder %s70, %s73
      %p79 = scmp.eq.s32.totalorder %s20, 0
      %p80 = por %p78, %p79
      %p81 = scmp.ne.s32.totalorder %s70, %s73
      %p82 = scmp.eq.s32.totalorder %s25, 3
      %p83 = por %p81, %p82
      %p84 = scmp.ne.s32.totalorder %s73, %s74
      %p85 = scmp.eq.s32.totalorder %s25, 0
      %p86 = por %p84, %p85
      %p87 = scmp.ne.s32.totalorder %s73, %s74
      %p88 = scmp.eq.s32.totalorder %s26, 3
      %p89 = por %p87, %p88
      %p91 = scmp.ne.s32.totalorder %s74, %s90
      %p92 = scmp.eq.s32.totalorder %s26, 0
      %p93 = por %p91, %p92
      %s95 = sadd.s32 %s94, 1
      %p98 = scmp.eq.s32.totalorder %s20, 3
      %p99 = scmp.ne.s32.totalorder %s94, %s96
      %p100 = scmp.eq.s32.totalorder %s20, 0
      %p101 = por %p99, %p100
      %p102 = scmp.ne.s32.totalorder %s94, %s96
      %p103 = scmp.eq.s32.totalorder %s25, 3
      %p104 = por %p102, %p103
      %p105 = scmp.ne.s32.totalorder %s96, %s97
      %p106 = scmp.eq.s32.totalorder %s25, 0
      %p107 = por %p105, %p106
      %p108 = scmp.ne.s32.totalorder %s96, %s97
      %p109 = scmp.eq.s32.totalorder %s26, 3
      %p110 = por %p108, %p109
      %p112 = scmp.ne.s32.totalorder %s97, %s111
      %p113 = scmp.eq.s32.totalorder %s26, 0
      %p114 = por %p112, %p113
      %s116 = sadd.s32 %s115, 1
      %p119 = scmp.eq.s32.totalorder %s20, 3
      %p120 = scmp.ne.s32.totalorder %s115, %s117
      %p121 = scmp.eq.s32.totalorder %s20, 0
      %p122 = por %p120, %p121
      %p123 = scmp.ne.s32.totalorder %s115, %s117
      %p124 = scmp.eq.s32.totalorder %s25, 3
      %p125 = por %p123, %p124
      %p126 = scmp.ne.s32.totalorder %s117, %s118
      %p127 = scmp.eq.s32.totalorder %s25, 0
      %p128 = por %p126, %p127
      %p129 = scmp.ne.s32.totalorder %s117, %s118
      %p130 = scmp.eq.s32.totalorder %s26, 3
      %p131 = por %p129, %p130
      %p133 = scmp.ne.s32.totalorder %s118, %s132
      %p134 = scmp.eq.s32.totalorder %s26, 0
      %p135 = por %p133, %p134
      %s136 = ssub.s32 %s27, %s39
      %p137 = scmp.eq.s32.totalorder %s136, 0
      %s139 = sadd.s32 %s138, 1
      %s140 = scalar_select %p137, %s138, %s139
      %p143 = pneg %p137
      %p144 = scmp.eq.s32.totalorder %s20, 3
      %p145 = por %p143, %p144
      %p146 = scmp.ne.s32.totalorder %s138, %s141
      %p147 = scmp.eq.s32.totalorder %s20, 0
      %p148 = por %p146, %p147
      %p149 = scmp.ne.s32.totalorder %s138, %s141
      %p150 = scmp.eq.s32.totalorder %s25, 3
      %p151 = por %p149, %p150
      %p152 = scmp.ne.s32.totalorder %s141, %s142
      %p153 = scmp.eq.s32.totalorder %s25, 0
      %p154 = por %p152, %p153
      %p155 = scmp.ne.s32.totalorder %s141, %s142
      %p156 = scmp.eq.s32.totalorder %s26, 3
      %p157 = por %p155, %p156
      %p159 = scmp.ne.s32.totalorder %s142, %s158
      %p160 = scmp.eq.s32.totalorder %s26, 0
      %p161 = por %p159, %p160
      %p162 = scmp.le.s32.totalorder 1, %s20
      %p163 = scmp.lt.s32.totalorder %s20, 5
      %p164 = pnand %p162, %p163
      %p165 = pneg %p164
      // Predicated region
      $region9: #{tpu_custom_call.1} parent=5 // pred_check
        _
      $region10: #{tpu_custom_call.1} parent=5 // pred_check_branch
        %167 = sbr.rel (%p164) target = $region12
      $region11: #{tpu_custom_call.1} parent=5 // pred_region
        %s168 = ssub.s32 %s20, 1
        // Predicated region
        $region13: #{tpu_custom_call.1} parent=11 // pred_check
          %p169 = pneg %p107
        $region14: #{tpu_custom_call.1} parent=11 // pred_check_branch
          %171 = sbr.rel (%p169) target = $region16
        $region15: #{tpu_custom_call.1} parent=11 // pred_region
          %s173 = ssub.s32 256, 256
          %174 = vsyncadd [#allocation7], %s173
          %s175 = sshll.u32 [#allocation8], 4
          %s176 = int_to_ptr.vmem [resolvable:$true] %s175
          %181 = dma.hbm_to_vmem [thread:$0]  %s2, 256, %s176, [#allocation7], 64, 64, 4
        $region16: #{tpu_custom_call.1} parent=11 // pred_fallthru
          _
        // Predicated region
        $region17: #{tpu_custom_call.1} parent=11 // pred_check
          %p182 = pneg %p128
        $region18: #{tpu_custom_call.1} parent=11 // pred_check_branch
          %184 = sbr.rel (%p182) target = $region20
        $region19: #{tpu_custom_call.1} parent=11 // pred_region
          %s186 = ssub.s32 256, 256
          %187 = vsyncadd [#allocation10], %s186
          %s188 = sshll.u32 [#allocation9], 4
          %s189 = int_to_ptr.vmem [resolvable:$true] %s188
          %194 = dma.hbm_to_vmem [thread:$0]  %s3, 256, %s189, [#allocation10], 64, 64, 4
        $region20: #{tpu_custom_call.1} parent=11 // pred_fallthru
          _
      $region12: #{tpu_custom_call.1} parent=5 // pred_fallthru
        _
      %p195 = scmp.lt.s32.totalorder %s20, 4
      // Predicated region
      $region21: #{tpu_custom_call.1} parent=5 // pred_check
        %p196 = pneg %p195
      $region22: #{tpu_custom_call.1} parent=5 // pred_check_branch
        %198 = sbr.rel (%p196) target = $region24
      $region23: #{tpu_custom_call.1} parent=5 // pred_region
        // Predicated region
        $region25: #{tpu_custom_call.1} parent=23 // pred_check
          %p199 = pneg %p54
        $region26: #{tpu_custom_call.1} parent=23 // pred_check_branch
          %201 = sbr.rel (%p199) target = $region28
        $region27: #{tpu_custom_call.1} parent=23 // pred_region
          %s202 = sand.u32 %s44, 1
          %s203 = scalar_lea.sflag [#allocation4], %s202
          %s204 = sand.u32 %s44, 1
          %s205 = smul.addr %s204, 4
          %s206 = scalar_lea.vmem [#allocation3], %s205
          %s208 = ssub.s32 64, 64
          %209 = vsyncadd %s203, %s208
          %s210 = smul.addr %s27, 2
          %s211 = sadd.s32 %s28, %s210
          %s212 = smul.addr %s211, 64
          %s213 = scalar_lea.hbm %s0, %s212
          %s215 = sshll.u32 %s206, 4
          %s216 = int_to_ptr.vmem [resolvable:$true] %s215
          %218 = dma.hbm_to_vmem [thread:$0]  %s213, 64, %s216, %s203
        $region28: #{tpu_custom_call.1} parent=23 // pred_fallthru
          _
        // Predicated region
        $region29: #{tpu_custom_call.1} parent=23 // pred_check
          %p219 = pneg %p80
        $region30: #{tpu_custom_call.1} parent=23 // pred_check_branch
          %221 = sbr.rel (%p219) target = $region32
        $region31: #{tpu_custom_call.1} parent=23 // pred_region
          %s222 = sand.u32 %s20, 1
          %s223 = scalar_lea.sflag [#allocation7], %s222
          %s224 = sand.u32 %s70, 1
          %s225 = smul.addr %s224, 8
          %s226 = scalar_lea.vmem [#allocation6], %s225
          %s228 = ssub.s32 128, 128
          %229 = vsyncadd %s223, %s228
          %s230 = smul.addr %s27, 2
          %s231 = smul.addr %s230, 64
          %s232 = scalar_lea.hbm %s1, %s231
          %s233 = sshll.u32 %s226, 4
          %s234 = int_to_ptr.vmem [resolvable:$true] %s233
          %239 = dma.hbm_to_vmem [thread:$0]  %s232, 128, %s234, %s223, 64, 64, 4
        $region32: #{tpu_custom_call.1} parent=23 // pred_fallthru
          _
      $region24: #{tpu_custom_call.1} parent=5 // pred_fallthru
        _
      %p240 = scmp.le.s32.totalorder 1, %s20
      %p241 = scmp.lt.s32.totalorder %s20, 5
      %p242 = pnand %p240, %p241
      %p243 = pneg %p242
      // Predicated region
      $region33: #{tpu_custom_call.1} parent=5 // pred_check
        _
      $region34: #{tpu_custom_call.1} parent=5 // pred_check_branch
        %245 = sbr.rel (%p242) target = $region36
      $region35: #{tpu_custom_call.1} parent=5 // pred_region
        %s246 = ssub.s32 %s20, 1
        %s247 = sand.u32 %s47, 1
        %s248 = scalar_lea.sflag [#allocation4], %s247
        %s249 = sand.u32 %s47, 1
        %s250 = smul.addr %s249, 4
        %s251 = scalar_lea.vmem [#allocation3], %s250
        // Predicated region
        $region37: #{tpu_custom_call.1} parent=35 // pred_check
          %p252 = pneg %p60
        $region38: #{tpu_custom_call.1} parent=35 // pred_check_branch
          %254 = sbr.rel (%p252) target = $region40
        $region39: #{tpu_custom_call.1} parent=35 // pred_region
          %255 = dma.done %s248, 64
        $region40: #{tpu_custom_call.1} parent=35 // pred_fallthru
          _
        %s256 = sand.u32 %s25, 1
        %s257 = scalar_lea.sflag [#allocation7], %s256
        %s258 = sand.u32 %s73, 1
        %s259 = smul.addr %s258, 8
        %s260 = scalar_lea.vmem [#allocation6], %s259
        // Predicated region
        $region41: #{tpu_custom_call.1} parent=35 // pred_check
          %p261 = pneg %p86
        $region42: #{tpu_custom_call.1} parent=35 // pred_check_branch
          %263 = sbr.rel (%p261) target = $region44
        $region43: #{tpu_custom_call.1} parent=35 // pred_region
          %264 = dma.done %s257, 128
        $region44: #{tpu_custom_call.1} parent=35 // pred_fallthru
          _
        // Predicated region
        $region45: #{tpu_custom_call.1} parent=35 // pred_check
          %p265 = pneg %p107
        $region46: #{tpu_custom_call.1} parent=35 // pred_check_branch
          %267 = sbr.rel (%p265) target = $region48
        $region47: #{tpu_custom_call.1} parent=35 // pred_region
          %268 = dma.done [#allocation7], 256
        $region48: #{tpu_custom_call.1} parent=35 // pred_fallthru
          _
        // Predicated region
        $region49: #{tpu_custom_call.1} parent=35 // pred_check
          %p269 = pneg %p128
        $region50: #{tpu_custom_call.1} parent=35 // pred_check_branch
          %271 = sbr.rel (%p269) target = $region52
        $region51: #{tpu_custom_call.1} parent=35 // pred_region
          %272 = dma.done [#allocation10], 256
        $region52: #{tpu_custom_call.1} parent=35 // pred_fallthru
          _
        %s273 = sand.u32 %s47, 1
        %s274 = scalar_lea.sflag [#allocation4], %s273
        %s275 = sand.u32 %s47, 1
        %s276 = smul.addr %s275, 4
        %s277 = scalar_lea.vmem [#allocation3], %s276
        %p278 = pneg %p60
        %p279 = pneg %p57
        %s280 = sand.u32 %s25, 1
        %s281 = scalar_lea.sflag [#allocation7], %s280
        %s282 = sand.u32 %s73, 1
        %s283 = smul.addr %s282, 8
        %s284 = scalar_lea.vmem [#allocation6], %s283
        %p285 = pneg %p86
        %p286 = pneg %p83
        %p287 = pneg %p107
        %p288 = pneg %p104
        %p289 = pneg %p128
        %p290 = pneg %p125
        %p291 = pneg %p154
        %p292 = pneg %p151
        %s293 = sand.u32 %s141, 1
        %s294 = scalar_lea.sflag [#allocation5], %s293
        %s295 = sand.u32 %s141, 1
        %s296 = scalar_lea.vmem [#allocation11], %s295
        %p298 = scmp.eq.s32.totalorder %s30, 0
        // Predicated region
        $region53: #{tpu_custom_call.1} parent=35 // pred_check
          %p299 = pneg %p298
        $region54: #{tpu_custom_call.1} parent=35 // pred_check_branch
          %301 = sbr.rel (%p299) target = $region56
        $region55: #{tpu_custom_call.1} parent=35 // pred_region
          %v302 = vld [vmem:[%s260] sm:$0xf]
          %v303 = vld [vmem:[%s260 + $0x4] sm:$0xf]
          %v304 = vld [vmem:[#allocation8] sm:$0xf]
          %v305 = vld [vmem:[#allocation8 + $0x4] sm:$0xf]
          %v306 = vld [vmem:[#allocation8 + $0x8] sm:$0xf]
          %v307 = vld [vmem:[#allocation8 + $0xc] sm:$0xf]
          %v310 = vunpack.c.l.b16 %v302
          %v311 = vunpack.c.l.b16 %v303
          %v312 = vpack.c.b16 %v311, %v310
          %v317 = vunpack.c.l.b16 %v304
          %v318 = vunpack.c.l.b16 %v305
          %v319 = vunpack.c.l.b16 %v306
          %v320 = vunpack.c.l.b16 %v307
          %v321 = vpack.c.b16 %v318, %v317
          %v322 = vpack.c.b16 %v320, %v319
          %vm325 = vcmask 261120
          %v327 = vsel %vm325, %v312, 0
          %329 = vmatprep.subr.bf16.mxu0 0
          %330 = vmatpush1.bf16.msra.mxu0 0
          %331 = vmatprep.subr.bf16.mxu0 0
          %332 = vmatpush1.bf16.msra.mxu0 0
          %333 = vmatprep.subr.bf16.mxu0 0
          %334 = vmatpush1.bf16.msra.mxu0 0
          %335 = vmatprep.subr.bf16.mxu0 0
          %336 = vmatpush1.bf16.msra.mxu0 0
          %337 = vmatprep.subr.bf16.mxu0 0
          %338 = vmatpush1.bf16.msra.mxu0 0
          %339 = vmatprep.subr.bf16.mxu0 0
          %340 = vmatpush1.bf16.msra.mxu0 0
          %341 = vmatprep.subr.bf16.mxu0 0
          %342 = vmatpush1.bf16.msra.mxu0 %v322
          %343 = vmatprep.subr.bf16.mxu0 0
          %344 = vmatpush1.bf16.msra.mxu0 %v321
          %345 = vmatprep.subr.bf16.mxu0 0
          %346 = vmatpush2.bf16.msra.mxu0 0
          %347 = vmatprep.subr.bf16.mxu0 0
          %348 = vmatpush2.bf16.msra.mxu0 0
          %349 = vmatprep.subr.bf16.mxu0 0
          %350 = vmatpush2.bf16.msra.mxu0 0
          %351 = vmatprep.subr.bf16.mxu0 0
          %352 = vmatpush2.bf16.msra.mxu0 0
          %353 = vmatprep.subr.bf16.mxu0 0
          %354 = vmatpush2.bf16.msra.mxu0 0
          %355 = vmatprep.subr.bf16.mxu0 0
          %356 = vmatpush2.bf16.msra.mxu0 0
          %357 = vmatprep.subr.bf16.mxu0 0
          %358 = vmatpush2.bf16.msra.mxu0 0
          %359 = vmatprep.subr.bf16.mxu0 0
          %360 = vmatpush2.bf16.msra.mxu0 0
          %361 = vmatprep.mubr.bf16.mxu0 0
          %362 = vmatmul.mubr.bf16.gmra.mxu0 %v327
          %v363 = vpop.f32.mrf.mxu0
          %v364 = vadd.f32 0.0, %v363
          %v365 = vpop.f32.mrf.mxu0
          %v366 = vpop.f32.mrf.mxu0
          %v367 = vadd.f32 0.0, %v366
          %v368 = vpop.f32.mrf.mxu0
          %369 = vdwg.mxu0
          %v370 = vmul.f32 %v364, %v364
          %v371 = vmul.f32 %v367, %v367
          %372 = vadd.xlane.f32.xlu0 %v370
          %v373 = vpop.xlane.xlu0 %372
          %374 = vadd.xlane.f32.xlu0 %v371
          %v375 = vpop.xlane.xlu0 %374
          %v376 = vmax.f32 %v373, 1e-24
          %v377 = vmax.f32 %v375, 1e-24
          %v378 = vrsqrt.pop %v376
          %v379 = vrsqrt.pop %v377
          %v380 = vmul.f32 %v364, %v378
          %v381 = vmul.f32 %v367, %v379
          %v382 = vpack.c.bf16 %v381, %v380
          %v384 = vunpack.c.l.b16 %v382
          %v385 = vunpack.c.h.b16 %v382
          %v386 = vpack.c.b16 %v384, %v384
          %v387 = vpack.c.b16 %v385, %v385
          %390 = vst [vmem:[#allocation2] sm:$0xf] %v386
          %391 = vst [vmem:[#allocation2 + $0x4] sm:$0xf] %v387
          %vm392 = vcmask 122880
          %393 = vst.msk [vmem:[%s296] sm:$0x1] %vm392, 0.0
        $region56: #{tpu_custom_call.1} parent=35 // pred_fallthru
          _
        %v394 = vld [vmem:[%s251] sm:$0xf]
        %v395 = vld [vmem:[#allocation9] sm:$0xf]
        %v396 = vld [vmem:[#allocation9 + $0x4] sm:$0xf]
        %v397 = vld [vmem:[#allocation9 + $0x8] sm:$0xf]
        %v398 = vld [vmem:[#allocation9 + $0xc] sm:$0xf]
        %v403 = vunpack.c.l.b16 %v395
        %v404 = vunpack.c.l.b16 %v396
        %v405 = vunpack.c.l.b16 %v397
        %v406 = vunpack.c.l.b16 %v398
        %v407 = vpack.c.b16 %v404, %v403
        %v408 = vpack.c.b16 %v406, %v405
        %vm411 = vcmask 261120
        %v413 = vsel %vm411, %v394, 0
        %415 = vmatprep.subr.bf16.mxu0 0
        %416 = vmatpush1.bf16.msra.mxu0 0
        %417 = vmatprep.subr.bf16.mxu0 0
        %418 = vmatpush1.bf16.msra.mxu0 0
        %419 = vmatprep.subr.bf16.mxu0 0
        %420 = vmatpush1.bf16.msra.mxu0 0
        %421 = vmatprep.subr.bf16.mxu0 0
        %422 = vmatpush1.bf16.msra.mxu0 0
        %423 = vmatprep.subr.bf16.mxu0 0
        %424 = vmatpush1.bf16.msra.mxu0 0
        %425 = vmatprep.subr.bf16.mxu0 0
        %426 = vmatpush1.bf16.msra.mxu0 0
        %427 = vmatprep.subr.bf16.mxu0 0
        %428 = vmatpush1.bf16.msra.mxu0 %v408
        %429 = vmatprep.subr.bf16.mxu0 0
        %430 = vmatpush1.bf16.msra.mxu0 %v407
        %431 = vmatprep.subr.bf16.mxu0 0
        %432 = vmatpush2.bf16.msra.mxu0 0
        %433 = vmatprep.subr.bf16.mxu0 0
        %434 = vmatpush2.bf16.msra.mxu0 0
        %435 = vmatprep.subr.bf16.mxu0 0
        %436 = vmatpush2.bf16.msra.mxu0 0
        %437 = vmatprep.subr.bf16.mxu0 0
        %438 = vmatpush2.bf16.msra.mxu0 0
        %439 = vmatprep.subr.bf16.mxu0 0
        %440 = vmatpush2.bf16.msra.mxu0 0
        %441 = vmatprep.subr.bf16.mxu0 0
        %442 = vmatpush2.bf16.msra.mxu0 0
        %443 = vmatprep.subr.bf16.mxu0 0
        %444 = vmatpush2.bf16.msra.mxu0 0
        %445 = vmatprep.subr.bf16.mxu0 0
        %446 = vmatpush2.bf16.msra.mxu0 0
        %447 = vmatprep.mubr.bf16.mxu0 0
        %448 = vmatmul.mubr.bf16.gmra.mxu0 %v413
        %v449 = vpop.f32.mrf.mxu0
        %v450 = vadd.f32 0.0, %v449
        %v451 = vpop.f32.mrf.mxu0
        %v452 = vpop.f32.mrf.mxu0
        %v453 = vpop.f32.mrf.mxu0
        %454 = vdwg.mxu0
        %v455 = vmul.f32 %v450, %v450
        %456 = vadd.xlane.f32.xlu0 %v455
        %v457 = vpop.xlane.xlu0 %456
        %v458 = vmax.f32 %v457, 1e-24
        %v459 = vrsqrt.pop %v458
        %v460 = vmul.f32 %v450, %v459
        %v461 = vpack.c.bf16 %v460, %v460
        %v462 = vld [vmem:[#allocation2] sm:$0xf]
        %v463 = vld [vmem:[#allocation2 + $0x4] sm:$0xf]
        %v466 = vunpack.c.l.b16 %v462
        %v467 = vunpack.c.l.b16 %v463
        %v468 = vpack.c.b16 %v467, %v466
        %470 = vmatprep.subr.bf16.mxu0 0
        %471 = vmatpush1.bf16.xpose.msra.mxu0 0
        %472 = vmatprep.subr.bf16.mxu0 0
        %473 = vmatpush1.bf16.xpose.msra.mxu0 0
        %474 = vmatprep.subr.bf16.mxu0 0
        %475 = vmatpush1.bf16.xpose.msra.mxu0 0
        %476 = vmatprep.subr.bf16.mxu0 0
        %477 = vmatpush1.bf16.xpose.msra.mxu0 0
        %478 = vmatprep.subr.bf16.mxu0 0
        %479 = vmatpush1.bf16.xpose.msra.mxu0 0
        %480 = vmatprep.subr.bf16.mxu0 0
        %481 = vmatpush1.bf16.xpose.msra.mxu0 0
        %482 = vmatprep.subr.bf16.mxu0 0
        %483 = vmatpush1.bf16.xpose.msra.mxu0 0
        %484 = vmatprep.subr.bf16.mxu0 0
        %485 = vmatpush1.bf16.xpose.msra.mxu0 %v468
        %486 = vmatprep.subr.bf16.mxu0 0
        %487 = vmatpush2.bf16.xpose.msra.mxu0 0
        %488 = vmatprep.subr.bf16.mxu0 0
        %489 = vmatpush2.bf16.xpose.msra.mxu0 0
        %490 = vmatprep.subr.bf16.mxu0 0
        %491 = vmatpush2.bf16.xpose.msra.mxu0 0
        %492 = vmatprep.subr.bf16.mxu0 0
        %493 = vmatpush2.bf16.xpose.msra.mxu0 0
        %494 = vmatprep.subr.bf16.mxu0 0
        %495 = vmatpush2.bf16.xpose.msra.mxu0 0
        %496 = vmatprep.subr.bf16.mxu0 0
        %497 = vmatpush2.bf16.xpose.msra.mxu0 0
        %498 = vmatprep.subr.bf16.mxu0 0
        %499 = vmatpush2.bf16.xpose.msra.mxu0 0
        %500 = vmatprep.subr.bf16.mxu0 0
        %501 = vmatpush2.bf16.xpose.msra.mxu0 0
        %502 = vmatprep.mubr.bf16.mxu0 0
        %503 = vmatmul.mubr.bf16.gmra.mxu0 %v461
        %v504 = vpop.f32.mrf.mxu0
        %v505 = vadd.f32 0.0, %v504
        %v506 = vpop.f32.mrf.mxu0
        %v507 = vpop.f32.mrf.mxu0
        %v508 = vpop.f32.mrf.mxu0
        %509 = vdwg.mxu0
        %vm510 = vcmask 130048
        %v511 = vsel %vm510, %v505, -inf
        %512 = vmax.xlane.f32.xlu0 %v511
        %v513 = vpop.xlane.xlu0 %512
        %v514 = vsub.f32 %v505, %v513
        %v515 = vmul.f32 %v514, 1.442695
        %v516 = vpow.pop %v515
        %v517 = vsel %vm510, %v516, 0.0
        %518 = vadd.xlane.f32.xlu0 %v517
        %v519 = vpop.xlane.xlu0 %518
        %v520 = vrcp.pop %v519
        %v521 = vmul.f32 %v516, %v520
        %v522 = vld [vmem:[%s296] sm:$0x1]
        %v523 = vsel %vm510, %v521, 0.0
        %v524 = vrot.slane %v523, 4
        %v525 = vadd.f32 %v523, %v524
        %v526 = vrot.slane %v525, 2
        %v527 = vadd.f32 %v525, %v526
        %v528 = vrot.slane %v527, 1
        %v529 = vadd.f32 %v527, %v528
        %v530 = vadd.f32 %v522, %v529
        %vm531 = vcmask 122880
        %532 = vst.msk [vmem:[%s296] sm:$0x1] %vm531, %v530
        %s533 = sand.u32 %s141, 1
        %s534 = scalar_lea.sflag [#allocation5], %s533
        %s535 = sand.u32 %s141, 1
        %s536 = scalar_lea.vmem [#allocation11], %s535
        // Predicated region
        $region57: #{tpu_custom_call.1} parent=35 // pred_check
          %p537 = pneg %p151
        $region58: #{tpu_custom_call.1} parent=35 // pred_check_branch
          %539 = sbr.rel (%p537) target = $region60
        $region59: #{tpu_custom_call.1} parent=35 // pred_region
          %s541 = ssub.s32 16, 16
          %542 = vsyncadd %s534, %s541
          %s543 = smul.addr %s29, 16
          %s544 = scalar_lea.hbm %s4, %s543
          %s546 = sshll.u32 %s536, 4
          %s547 = int_to_ptr.vmem [resolvable:$true] %s546
          %549 = dma.vmem_to_hbm [thread:$0]  %s547, 16, %s544, %s534
        $region60: #{tpu_custom_call.1} parent=35 // pred_fallthru
          _
      $region36: #{tpu_custom_call.1} parent=5 // pred_fallthru
        _
      %p550 = scmp.le.s32.totalorder 2, %s20
      // Predicated region
      $region61: #{tpu_custom_call.1} parent=5 // pred_check
        %p551 = pneg %p550
      $region62: #{tpu_custom_call.1} parent=5 // pred_check_branch
        %553 = sbr.rel (%p551) target = $region64
      $region63: #{tpu_custom_call.1} parent=5 // pred_region
        %s554 = ssub.s32 %s20, 2
        // Predicated region
        $region65: #{tpu_custom_call.1} parent=63 // pred_check
          %p555 = pneg %p157
        $region66: #{tpu_custom_call.1} parent=63 // pred_check_branch
          %557 = sbr.rel (%p555) target = $region68
        $region67: #{tpu_custom_call.1} parent=63 // pred_region
          %s558 = sand.u32 %s142, 1
          %s559 = scalar_lea.sflag [#allocation5], %s558
          %s560 = sand.u32 %s142, 1
          %s561 = scalar_lea.vmem [#allocation11], %s560
          %562 = dma.done %s559, 16
        $region68: #{tpu_custom_call.1} parent=63 // pred_fallthru
          _
      $region64: #{tpu_custom_call.1} parent=5 // pred_fallthru
        _
    $region6: #{tpu_custom_call.1} parent=1 // loop_footer
      %s24 = sadd.s32 1, %s20
    $region7: #{tpu_custom_call.1} parent=1 // loop_footer_branch
      %19 = sbr.rel target = $region3
    $region8: #{tpu_custom_call.1} parent=1 // loop_exit
      _
    %563 = vsyncpa [#allocation4], 1
    %s564 = scalar_lea.sflag [#allocation4], 1
    %565 = vsyncpa %s564, 1
    %566 = vsyncpa [#allocation7], 1
    %s567 = scalar_lea.sflag [#allocation7], 1
    %568 = vsyncpa %s567, 1
    %569 = vsyncpa [#allocation10], 1
    %570 = vsyncpa [#allocation5], 1
    %s571 = scalar_lea.sflag [#allocation5], 1
    %572 = vsyncpa %s571, 1

</llo_original>
